<compile_context>
chip_gen: v5e
topology: v5e:2x2
jax: 0.10.0
libtpu: 0.0.40
codegen_flags: <defaults>
</compile_context>

<pallas_src>
import jax
import jax.numpy as jnp
import numpy as np
from jax.experimental import pallas as pl
from jax.experimental.pallas import tpu as pltpu


def _round_up(x, m):
    return (x + m - 1) // m * m


# ---------------------------------------------------------------------------
# Cox partial negative log-likelihood
# ---------------------------------------------------------------------------
def _cox_rowloss_kernel(yi_expr_ref, y_j_ref, r_j_ref, e_j_ref,
                        out_ref, num_acc, den_acc):
    """Grid = (j tiles [parallel], i tiles [arbitrary, innermost reduction])."""
    i = pl.program_id(1)

    @pl.when(i == 0)
    def _():
        num_acc[...] = jnp.zeros_like(num_acc)
        den_acc[...] = jnp.zeros_like(den_acc)

    y_i = yi_expr_ref[:, 0:1]      # (TI, 1)  event times of risk-set candidates
    expr_i = yi_expr_ref[:, 1:2]   # (TI, 1)  exp(risk_pred - max), hoisted in wrapper
    y_j = y_j_ref[...]             # (1, TJ)  event times of the output columns

    # torch: mask = ones; mask[y.T - y > 0] = 0  ->  drop i where y[i] < y[j].
    # Direct strict compare (same tie semantics), fused select: no explicit
    # (TI,TJ) mask, no extra N^2 subtract or multiply.
    drop = y_i < y_j                                                          # (TI, TJ)
    num_acc[...] += jnp.sum(jnp.where(drop, 0.0, expr_i), axis=0, keepdims=True)
    # den counted in f32: exact up to 2^24 (~16.7M) risk-set members per column.
    den_acc[...] += jnp.sum(jnp.where(drop, 0.0, 1.0), axis=0, keepdims=True)

    @pl.when(i == pl.num_programs(1) - 1)
    def _():
        # log(num/den) == log(num) - log(den): EUP ops, no vector divide.
        log_loss = jnp.log(num_acc[...]) - jnp.log(den_acc[...])
        out_ref[...] = (r_j_ref[...] - log_loss) * e_j_ref[...]


def cox_neg_log_likelihood(risk_pred, y, e, *, tile_i=512, tile_j=2048):
    """-sum((risk_pred - log_loss) * e) / sum(e), per the PyTorch reference."""
    N = risk_pred.shape[0]
    r = risk_pred.reshape(-1).astype(jnp.float32)
    yv = y.reshape(-1).astype(jnp.float32)
    ev = e.reshape(-1).astype(jnp.float32)

    n128 = _round_up(N, 128)

    # j (output / lane) tile: big for lane-dense stores, but keep >= 2 j-tiles
    # whenever possible so the "parallel" axis can shard across v7x's 2 TCs.
    tj = min(_round_up(tile_j, 128), n128)
    if n128 >= 256:
        tj = min(tj, _round_up(n128 // 2, 128))
    # i (risk-set reduction) tile.
    ti = min(_round_up(tile_i, 128), n128)

    n_pad_j = _round_up(N, tj)
    n_pad_i = _round_up(N, ti)

    # exp(risk_pred) hoisted out of the O(N^2) loop.  Max-shift for overflow
    # safety: (r - m) - (log_loss - m) == r - log_loss, so the result is
    # mathematically identical to the (unstabilized) PyTorch reference.
    m = jnp.max(r)
    r_shift = r - m
    expr = jnp.exp(r_shift)

    # Packed i-axis input: padded rows get y=-1e30 (dropped from every real
    # risk set) and exp=0, so they contribute nothing to real columns.
    pad_i = n_pad_i - N
    y_i_pad = jnp.pad(yv, (0, pad_i), constant_values=-1e30)
    expr_pad = jnp.pad(expr, (0, pad_i))
    yi_expr = jnp.stack([y_i_pad, expr_pad], axis=1)          # (n_pad_i, 2)

    # j-axis (output) views, lane-dense.  Padded columns have e=0 -> weight 0,
    # and y=-1e30 -> nothing dropped -> num>0, so no NaN/Inf leaks.
    pad_j = n_pad_j - N
    y_row = jnp.pad(yv, (0, pad_j), constant_values=-1e30).reshape(1, n_pad_j)
    r_row = jnp.pad(r_shift, (0, pad_j)).reshape(1, n_pad_j)
    e_row = jnp.pad(ev, (0, pad_j)).reshape(1, n_pad_j)

    grid = (n_pad_j // tj, n_pad_i // ti)     # (j tiles, i tiles); i innermost

    weighted = pl.pallas_call(
        _cox_rowloss_kernel,
        out_shape=jax.ShapeDtypeStruct((1, n_pad_j), jnp.float32),
        grid_spec=pltpu.PrefetchScalarGridSpec(
            num_scalar_prefetch=0,
            grid=grid,
            in_specs=[
                pl.BlockSpec((ti, 2), lambda j, i: (i, 0)),   # packed [y, exp(r)] (risk-set axis)
                pl.BlockSpec((1, tj), lambda j, i: (0, j)),   # y         (output axis)
                pl.BlockSpec((1, tj), lambda j, i: (0, j)),   # risk_pred (output axis, shifted)
                pl.BlockSpec((1, tj), lambda j, i: (0, j)),   # e         (output axis)
            ],
            out_specs=pl.BlockSpec((1, tj), lambda j, i: (0, j)),
            scratch_shapes=[pltpu.VMEM((1, tj), jnp.float32),   # num accumulator
                            pltpu.VMEM((1, tj), jnp.float32)],  # den accumulator
        ),
        compiler_params=pltpu.CompilerParams(
            dimension_semantics=("parallel", "arbitrary"),
            vmem_limit_bytes=48 * 1024 * 1024),
    )(yi_expr, y_row, r_row, e_row)

    per_sample = weighted[0, :N]                       # (risk_pred - log_loss) * e
    sum_e = jnp.sum(ev)
    safe_sum_e = jnp.where(sum_e != 0.0, sum_e, 1.0)   # no NaN through the dead branch
    neg = -jnp.sum(per_sample) / safe_sum_e
    return jnp.where(sum_e != 0.0, neg, 0.0)


# ---------------------------------------------------------------------------
# L2 regularization: sum of ||w||_2 over params with 'weight' in the name.
# One pallas_call over a stacked/zero-padded (W_pad, K_pad) buffer, gridded
# over the K axis (no untiled whole-array VMEM load).
# ---------------------------------------------------------------------------
def _l2_norm_sum_kernel(w_ref, out_ref, ssq_acc):
    k = pl.program_id(0)

    @pl.when(k == 0)
    def _():
        ssq_acc[...] = jnp.zeros_like(ssq_acc)

    w = w_ref[...]                                               # (W_pad, Kb)
    ssq_acc[...] += jnp.sum(w * w, axis=1, keepdims=True)        # per-tensor sum sq

    @pl.when(k == pl.num_programs(0) - 1)
    def _():
        # zero-padded rows contribute sqrt(0) = 0
        out_ref[...] = jnp.sum(jnp.sqrt(ssq_acc[...]), axis=0, keepdims=True)


def l2_weight_norm_sum(weights, *, k_block=4096):
    if not weights:
        return jnp.float32(0.0)
    flats = [jnp.ravel(w).astype(jnp.float32) for w in weights]
    kmax = max(f.shape[0] for f in flats)
    kb = min(_round_up(k_block, 128), _round_up(kmax, 128))
    k_pad = _round_up(kmax, kb)
    rows = [jnp.pad(f, (0, k_pad - f.shape[0])).reshape(1, k_pad) for f in flats]
    w_rows = _round_up(len(rows), 8)
    rows += [jnp.zeros((1, k_pad), jnp.float32)] * (w_rows - len(rows))
    stacked = jnp.concatenate(rows, axis=0)                      # (W_pad, K_pad)

    out = pl.pallas_call(
        _l2_norm_sum_kernel,
        out_shape=jax.ShapeDtypeStruct((1, 1), jnp.float32),
        grid_spec=pltpu.PrefetchScalarGridSpec(
            num_scalar_prefetch=0,
            grid=(k_pad // kb,),
            in_specs=[pl.BlockSpec((w_rows, kb), lambda k: (0, k))],
            out_specs=pl.BlockSpec((1, 1), lambda k: (0, 0)),
            scratch_shapes=[pltpu.VMEM((w_rows, 1), jnp.float32)],
        ),
        compiler_params=pltpu.CompilerParams(
            dimension_semantics=("arbitrary",)),
    )(stacked)
    return out[0, 0]


class NegativeLogLikelihoodPallas:
    """JAX/Pallas equivalent of the PyTorch NegativeLogLikelihood criterion."""

    def __init__(self, aae_l2_reg, tile_i=512, tile_j=2048):
        self.weight_decay = aae_l2_reg    # Regularization(order=2, weight_decay=aae_l2_reg)
        self.tile_i = tile_i
        self.tile_j = tile_j

    def __call__(self, risk_pred, y, e, named_params):
        neg_log_loss = cox_neg_log_likelihood(risk_pred, y, e,
                                              tile_i=self.tile_i, tile_j=self.tile_j)
        weights = [w for name, w in named_params if "weight" in name]
        reg = l2_weight_norm_sum(weights)
        return neg_log_loss + self.weight_decay * reg


def _reference(risk_pred, y, e, named_params, weight_decay):
    """Plain-jnp transcription of the PyTorch forward (self-check only)."""
    mask = jnp.where((y.T - y) > 0, 0.0, 1.0)
    num = jnp.sum(jnp.exp(risk_pred) * mask, axis=0)
    den = jnp.sum(mask, axis=0)
    log_loss = jnp.log(num / den).reshape(-1, 1)
    sum_e = jnp.sum(e)
    neg = jnp.where(sum_e != 0.0,
                    -jnp.sum((risk_pred - log_loss) * e)
                    / jnp.where(sum_e != 0.0, sum_e, 1.0),
                    0.0)
    reg = sum(jnp.sqrt(jnp.sum(jnp.square(w.astype(jnp.float32))))
              for name, w in named_params if "weight" in name)
    return neg + weight_decay * reg


if __name__ == "__main__":
    key = jax.random.PRNGKey(0)
    k1, k2, k3, k4, k5 = jax.random.split(key, 5)

    N = 256        # survival samples
    hidden = 32
    feat = 16

    risk_pred = jax.random.normal(k1, (N, 1), dtype=jnp.float32)
    y = jax.random.uniform(k2, (N, 1), dtype=jnp.float32, minval=0.0, maxval=10.0)
    e = (jax.random.uniform(k3, (N, 1)) > 0.4).astype(jnp.float32)
    e = e.at[0, 0].set(1.0)   # guarantee sum(e) != 0

    # synthetic "model" parameters; only names containing 'weight' are regularized
    named_params = [
        ("fc1.weight", 0.1 * jax.random.normal(k4, (hidden, feat), dtype=jnp.float32)),
        ("fc1.bias", jnp.zeros((hidden,), jnp.float32)),
        ("fc2.weight", 0.1 * jax.random.normal(k5, (1, hidden), dtype=jnp.float32)),
        ("fc2.bias", jnp.zeros((1,), jnp.float32)),
    ]

    ref = _reference(risk_pred, y, e, named_params, 1e-4)

    # Small tiles -> real (2 x 2) grid, exercises the accumulator/finalize path.
    crit_small = NegativeLogLikelihoodPallas(aae_l2_reg=1e-4, tile_i=128, tile_j=128)
    loss_small = crit_small(risk_pred, y, e, named_params)
    jax.block_until_ready(loss_small)
    np.testing.assert_allclose(np.asarray(loss_small), np.asarray(ref),
                               rtol=2e-4, atol=1e-5)

    # Default (large, clamped) tiles -> single i-tile + >=2 j-tiles path.
    crit_default = NegativeLogLikelihoodPallas(aae_l2_reg=1e-4)
    loss_default = crit_default(risk_pred, y, e, named_params)
    jax.block_until_ready(loss_default)
    np.testing.assert_allclose(np.asarray(loss_default), np.asarray(ref),
                               rtol=2e-4, atol=1e-5)

    print("KERNEL_OK")
</pallas_src>

<mosaic_0001>
module attributes {stable_mosaic.version = 11 : i64} {
  func.func @_cox_rowloss_kernel(%arg0: i32, %arg1: i32, %arg2: memref<128x2xf32, #tpu.memory_space<vmem>>, %arg3: memref<1x128xf32, #tpu.memory_space<vmem>>, %arg4: memref<1x128xf32, #tpu.memory_space<vmem>>, %arg5: memref<1x128xf32, #tpu.memory_space<vmem>>, %arg6: memref<1x128xf32, #tpu.memory_space<vmem>>, %arg7: memref<1x128xf32, #tpu.memory_space<vmem>>, %arg8: memref<1x128xf32, #tpu.memory_space<vmem>>) attributes {dimension_semantics = [#tpu.dimension_semantics<parallel>, #tpu.dimension_semantics<arbitrary>], iteration_bounds = array<i64: 2, 2>, scalar_prefetch = 0 : i64, scratch_operands = 2 : i64, tpu.core_type = #tpu.core_type<tc>, window_params = [{transform_indices = @transform_0, window_bounds = array<i64: 128, 2>}, {transform_indices = @transform_1, window_bounds = array<i64: 1, 128>}, {transform_indices = @transform_2, window_bounds = array<i64: 1, 128>}, {transform_indices = @transform_3, window_bounds = array<i64: 1, 128>}, {transform_indices = @transform_4, window_bounds = array<i64: 1, 128>}]} {
    %c0_i32 = arith.constant 0 : i32
    %0 = arith.cmpi eq, %arg1, %c0_i32 : i32
    %1 = arith.extui %0 : i1 to i32
    %c0_i32_0 = arith.constant 0 : i32
    %2 = arith.cmpi ne, %1, %c0_i32_0 : i32
    scf.if %2 {
      %cst_18 = arith.constant 0.000000e+00 : f32
      %29 = vector.broadcast %cst_18 : f32 to vector<1x128xf32>
      %c0_19 = arith.constant 0 : index
      %c0_20 = arith.constant 0 : index
      %30 = vector.load %arg7[%c0_19, %c0_20] : memref<1x128xf32, #tpu.memory_space<vmem>>, vector<1x128xf32>
      tpu.vector_store %arg7[%c0_19, %c0_20], %29 {strides = array<i32>} : memref<1x128xf32, #tpu.memory_space<vmem>>, vector<1x128xf32>,
      %cst_21 = arith.constant 0.000000e+00 : f32
      %31 = vector.broadcast %cst_21 : f32 to vector<1x128xf32>
      %c0_22 = arith.constant 0 : index
      %c0_23 = arith.constant 0 : index
      %32 = vector.load %arg8[%c0_22, %c0_23] : memref<1x128xf32, #tpu.memory_space<vmem>>, vector<1x128xf32>
      tpu.vector_store %arg8[%c0_22, %c0_23], %31 {strides = array<i32>} : memref<1x128xf32, #tpu.memory_space<vmem>>, vector<1x128xf32>,
    } else {
    }
    %c0 = arith.constant 0 : index
    %c0_1 = arith.constant 0 : index
    %3 = vector.load %arg2[%c0, %c0_1] : memref<128x2xf32, #tpu.memory_space<vmem>>, vector<128x1xf32>
    %c0_2 = arith.constant 0 : index
    %c1 = arith.constant 1 : index
    %4 = vector.load %arg2[%c0_2, %c1] : memref<128x2xf32, #tpu.memory_space<vmem>>, vector<128x1xf32>
    %c0_3 = arith.constant 0 : index
    %c0_4 = arith.constant 0 : index
    %5 = vector.load %arg3[%c0_3, %c0_4] : memref<1x128xf32, #tpu.memory_space<vmem>>, vector<1x128xf32>
    %6 = vector.broadcast %3 : vector<128x1xf32> to vector<128x128xf32>
    %7 = vector.broadcast %5 : vector<1x128xf32> to vector<128x128xf32>
    %8 = arith.cmpf olt, %6, %7 : vector<128x128xf32>
    %c0_5 = arith.constant 0 : index
    %c0_6 = arith.constant 0 : index
    %9 = vector.load %arg7[%c0_5, %c0_6] : memref<1x128xf32, #tpu.memory_space<vmem>>, vector<1x128xf32>
    %cst = arith.constant 0.000000e+00 : f32
    %10 = vector.broadcast %cst : f32 to vector<128x128xf32>
    %11 = vector.shape_cast %4 : vector<128x1xf32> to vector<128x1xf32>
    %12 = vector.broadcast %11 : vector<128x1xf32> to vector<128x128xf32>
    %13 = arith.select %8, %10, %12 : vector<128x128xi1>, vector<128x128xf32>
    %cst_7 = arith.constant dense<0.000000e+00> : vector<128xf32>
    %14 = vector.multi_reduction <add>, %13, %cst_7 [0] : vector<128x128xf32> to vector<128xf32>
    %15 = vector.shape_cast %14 : vector<128xf32> to vector<1x128xf32>
    %16 = arith.addf %9, %15 : vector<1x128xf32>
    %c0_8 = arith.constant 0 : index
    %c0_9 = arith.constant 0 : index
    %17 = vector.load %arg7[%c0_8, %c0_9] : memref<1x128xf32, #tpu.memory_space<vmem>>, vector<1x128xf32>
    tpu.vector_store %arg7[%c0_8, %c0_9], %16 {strides = array<i32>} : memref<1x128xf32, #tpu.memory_space<vmem>>, vector<1x128xf32>,
    %c0_10 = arith.constant 0 : index
    %c0_11 = arith.constant 0 : index
    %18 = vector.load %arg8[%c0_10, %c0_11] : memref<1x128xf32, #tpu.memory_space<vmem>>, vector<1x128xf32>
    %cst_12 = arith.constant 0.000000e+00 : f32
    %cst_13 = arith.constant 1.000000e+00 : f32
    %19 = vector.broadcast %cst_12 : f32 to vector<128x128xf32>
    %20 = vector.broadcast %cst_13 : f32 to vector<128x128xf32>
    %21 = arith.select %8, %19, %20 : vector<128x128xi1>, vector<128x128xf32>
    %cst_14 = arith.constant dense<0.000000e+00> : vector<128xf32>
    %22 = vector.multi_reduction <add>, %21, %cst_14 [0] : vector<128x128xf32> to vector<128xf32>
    %23 = vector.shape_cast %22 : vector<128xf32> to vector<1x128xf32>
    %24 = arith.addf %18, %23 : vector<1x128xf32>
    %c0_15 = arith.constant 0 : index
    %c0_16 = arith.constant 0 : index
    %25 = vector.load %arg8[%c0_15, %c0_16] : memref<1x128xf32, #tpu.memory_space<vmem>>, vector<1x128xf32>
    tpu.vector_store %arg8[%c0_15, %c0_16], %24 {strides = array<i32>} : memref<1x128xf32, #tpu.memory_space<vmem>>, vector<1x128xf32>,
    %c1_i32 = arith.constant 1 : i32
    %26 = arith.cmpi eq, %arg1, %c1_i32 : i32
    %27 = arith.extui %26 : i1 to i32
    %c0_i32_17 = arith.constant 0 : i32
    %28 = arith.cmpi ne, %27, %c0_i32_17 : i32
    scf.if %28 {
      %c0_18 = arith.constant 0 : index
      %c0_19 = arith.constant 0 : index
      %29 = vector.load %arg7[%c0_18, %c0_19] : memref<1x128xf32, #tpu.memory_space<vmem>>, vector<1x128xf32>
      %30 = math.log %29 : vector<1x128xf32>
      %c0_20 = arith.constant 0 : index
      %c0_21 = arith.constant 0 : index
      %31 = vector.load %arg8[%c0_20, %c0_21] : memref<1x128xf32, #tpu.memory_space<vmem>>, vector<1x128xf32>
      %32 = math.log %31 : vector<1x128xf32>
      %33 = arith.subf %30, %32 : vector<1x128xf32>
      %c0_22 = arith.constant 0 : index
      %c0_23 = arith.constant 0 : index
      %34 = vector.load %arg4[%c0_22, %c0_23] : memref<1x128xf32, #tpu.memory_space<vmem>>, vector<1x128xf32>
      %35 = arith.subf %34, %33 : vector<1x128xf32>
      %c0_24 = arith.constant 0 : index
      %c0_25 = arith.constant 0 : index
      %36 = vector.load %arg5[%c0_24, %c0_25] : memref<1x128xf32, #tpu.memory_space<vmem>>, vector<1x128xf32>
      %37 = arith.mulf %35, %36 : vector<1x128xf32>
      %c0_26 = arith.constant 0 : index
      %c0_27 = arith.constant 0 : index
      %38 = vector.load %arg6[%c0_26, %c0_27] : memref<1x128xf32, #tpu.memory_space<vmem>>, vector<1x128xf32>
      tpu.vector_store %arg6[%c0_26, %c0_27], %37 {strides = array<i32>} : memref<1x128xf32, #tpu.memory_space<vmem>>, vector<1x128xf32>,
    } else {
    }
    return
  }
  func.func @transform_0(%arg0: i32, %arg1: i32) -> (i32, i32) {
    %c0_i32 = arith.constant 0 : i32
    %c0_i32_0 = arith.constant 0 : i32
    return %arg1, %c0_i32 : i32, i32
  }
  func.func @transform_1(%arg0: i32, %arg1: i32) -> (i32, i32) {
    %c0_i32 = arith.constant 0 : i32
    %c0_i32_0 = arith.constant 0 : i32
    return %c0_i32, %arg0 : i32, i32
  }
  func.func @transform_2(%arg0: i32, %arg1: i32) -> (i32, i32) {
    %c0_i32 = arith.constant 0 : i32
    %c0_i32_0 = arith.constant 0 : i32
    return %c0_i32, %arg0 : i32, i32
  }
  func.func @transform_3(%arg0: i32, %arg1: i32) -> (i32, i32) {
    %c0_i32 = arith.constant 0 : i32
    %c0_i32_0 = arith.constant 0 : i32
    return %c0_i32, %arg0 : i32, i32
  }
  func.func @transform_4(%arg0: i32, %arg1: i32) -> (i32, i32) {
    %c0_i32 = arith.constant 0 : i32
    %c0_i32_0 = arith.constant 0 : i32
    return %c0_i32, %arg0 : i32, i32
  }
}

</mosaic_0001>

<llo_original>
// kernel: tpu_custom_call.1
$region0: #{tpu_custom_call.1}
  #allocation0 [shape = 'u32[]', space=smem, size = 0x4, offset = 0x4, fixed_abs, tag = 'smem constant byte address 0x4 - core index']
  #allocation1 [shape = 'u32[72,128]{1,0:T(1,128)}', space=vmem, size = 0x9000, scoped, tag = 'internal scratch']
  #allocation2 [shape = 'f32[1,128]{1,0:T(1,128)}', space=vmem, size = 0x200, scoped, tag = 'scratch operand']
  #allocation3 [shape = 'f32[1,128]{1,0:T(1,128)}', space=vmem, size = 0x200, scoped, tag = 'scratch operand']
  %s0 = inlined_call_operand.vmem [shape: f32[256,2], index: 0, kind: input, shape index: {}]
  %s1 = inlined_call_operand.vmem [shape: f32[1,256], index: 1, kind: input, shape index: {}]
  %s2 = inlined_call_operand.vmem [shape: f32[1,256], index: 2, kind: input, shape index: {}]
  %s3 = inlined_call_operand.vmem [shape: f32[1,256], index: 3, kind: input, shape index: {}]
  %s4 = inlined_call_operand.hbm [shape: f32[1,256], index: 4, kind: output, shape index: {}]
  %s5 = sld [smem:[#allocation0]]
  $region57: #{tpu_custom_call.1} parent=0
    _
  %s7 = ssub.s32 1, %s5
  %s8 = scalar_select 0, %s7, %s5
  $region1: #{tpu_custom_call.1} parent=0
    #allocation4 [shape = 'u8[1024]{0}', space=vmem, size = 0x400, scoped, tag = 'output window, operand 0']
    #allocation5 [shape = 's32[2]{0}', space=sflag, size = 0x8, scoped, tag = 'scoped memory for tpu_custom_call.1']
    %9 = vsyncpa [#allocation5], 0
    %s10 = scalar_lea.sflag [#allocation5], 1
    %11 = vsyncpa %s10, 0
    loop: start=0, step=1, limit=6
    $region2: #{tpu_custom_call.1} parent=1 // loop_pre_header
      _
    $region3: #{tpu_custom_call.1} parent=1 // loop_header
      %s13 = sphi 0, %s17
      %p14 = scmp.ge.s32.totalorder %s13, 6
      %s20 = sphi 0, %s32
      %s21 = sphi 0, %s28
      %s22 = sphi 0, %s20
      %s23 = sphi 0, %s21
      %s24 = sphi 0, %s22
      %s25 = sphi 0, %s23
      %s35 = sphi 0, %s37
      %s38 = sphi 0, %s35
      %s39 = sphi 0, %s38
      %s55 = sphi 0, %s39
      %s61 = sphi 0, %s63
      %s64 = sphi 0, %s61
      %s65 = sphi 0, %s64
      %s81 = sphi 0, %s65
      %s87 = sphi 0, %s89
      %s90 = sphi 0, %s87
      %s91 = sphi 0, %s90
      %s107 = sphi 0, %s91
      %s113 = sphi 0, %s115
      %s116 = sphi 0, %s113
      %s117 = sphi 0, %s116
      %s133 = sphi 0, %s117
      %s139 = sphi 0, %s141
      %s142 = sphi 0, %s139
      %s143 = sphi 0, %s142
      %s159 = sphi 0, %s143
    $region4: #{tpu_custom_call.1} parent=1 // loop_header_branch
      %16 = sbr.rel (%p14) target = $region8
    $region5: #{tpu_custom_call.1} parent=1 // loop_body
      %s18 = ssub.s32 %s13, 1
      %s19 = ssub.s32 %s13, 2
      %s26 = sadd.s32 1, %s21
      %p27 = scmp.ge.s32.totalorder %s26, 2
      %s28 = scalar_select %p27, 0, %s26
      %s29 = sadd.s32 1, %s20
      %s30 = scalar_select %p27, %s29, %s20
      %p31 = scmp.ge.s32.totalorder %s30, 2
      %s32 = scalar_select %p31, 0, %s30
      %s33 = ssub.s32 %s21, %s28
      %p34 = scmp.eq.s32.totalorder %s33, 0
      %s36 = sadd.s32 %s35, 1
      %s37 = scalar_select %p34, %s35, %s36
      %p40 = pneg %p34
      %p41 = scmp.eq.s32.totalorder %s13, 3
      %p42 = por %p40, %p41
      %p43 = scmp.ne.s32.totalorder %s35, %s38
      %p44 = scmp.eq.s32.totalorder %s13, 0
      %p45 = por %p43, %p44
      %p46 = scmp.ne.s32.totalorder %s35, %s38
      %p47 = scmp.eq.s32.totalorder %s18, 3
      %p48 = por %p46, %p47
      %p49 = scmp.ne.s32.totalorder %s38, %s39
      %p50 = scmp.eq.s32.totalorder %s18, 0
      %p51 = por %p49, %p50
      %p52 = scmp.ne.s32.totalorder %s38, %s39
      %p53 = scmp.eq.s32.totalorder %s19, 3
      %p54 = por %p52, %p53
      %p56 = scmp.ne.s32.totalorder %s39, %s55
      %p57 = scmp.eq.s32.totalorder %s19, 0
      %p58 = por %p56, %p57
      %s59 = ssub.s32 %s20, %s32
      %p60 = scmp.eq.s32.totalorder %s59, 0
      %s62 = sadd.s32 %s61, 1
      %s63 = scalar_select %p60, %s61, %s62
      %p66 = pneg %p60
      %p67 = scmp.eq.s32.totalorder %s13, 3
      %p68 = por %p66, %p67
      %p69 = scmp.ne.s32.totalorder %s61, %s64
      %p70 = scmp.eq.s32.totalorder %s13, 0
      %p71 = por %p69, %p70
      %p72 = scmp.ne.s32.totalorder %s61, %s64
      %p73 = scmp.eq.s32.totalorder %s18, 3
      %p74 = por %p72, %p73
      %p75 = scmp.ne.s32.totalorder %s64, %s65
      %p76 = scmp.eq.s32.totalorder %s18, 0
      %p77 = por %p75, %p76
      %p78 = scmp.ne.s32.totalorder %s64, %s65
      %p79 = scmp.eq.s32.totalorder %s19, 3
      %p80 = por %p78, %p79
      %p82 = scmp.ne.s32.totalorder %s65, %s81
      %p83 = scmp.eq.s32.totalorder %s19, 0
      %p84 = por %p82, %p83
      %s85 = ssub.s32 %s20, %s32
      %p86 = scmp.eq.s32.totalorder %s85, 0
      %s88 = sadd.s32 %s87, 1
      %s89 = scalar_select %p86, %s87, %s88
      %p92 = pneg %p86
      %p93 = scmp.eq.s32.totalorder %s13, 3
      %p94 = por %p92, %p93
      %p95 = scmp.ne.s32.totalorder %s87, %s90
      %p96 = scmp.eq.s32.totalorder %s13, 0
      %p97 = por %p95, %p96
      %p98 = scmp.ne.s32.totalorder %s87, %s90
      %p99 = scmp.eq.s32.totalorder %s18, 3
      %p100 = por %p98, %p99
      %p101 = scmp.ne.s32.totalorder %s90, %s91
      %p102 = scmp.eq.s32.totalorder %s18, 0
      %p103 = por %p101, %p102
      %p104 = scmp.ne.s32.totalorder %s90, %s91
      %p105 = scmp.eq.s32.totalorder %s19, 3
      %p106 = por %p104, %p105
      %p108 = scmp.ne.s32.totalorder %s91, %s107
      %p109 = scmp.eq.s32.totalorder %s19, 0
      %p110 = por %p108, %p109
      %s111 = ssub.s32 %s20, %s32
      %p112 = scmp.eq.s32.totalorder %s111, 0
      %s114 = sadd.s32 %s113, 1
      %s115 = scalar_select %p112, %s113, %s114
      %p118 = pneg %p112
      %p119 = scmp.eq.s32.totalorder %s13, 3
      %p120 = por %p118, %p119
      %p121 = scmp.ne.s32.totalorder %s113, %s116
      %p122 = scmp.eq.s32.totalorder %s13, 0
      %p123 = por %p121, %p122
      %p124 = scmp.ne.s32.totalorder %s113, %s116
      %p125 = scmp.eq.s32.totalorder %s18, 3
      %p126 = por %p124, %p125
      %p127 = scmp.ne.s32.totalorder %s116, %s117
      %p128 = scmp.eq.s32.totalorder %s18, 0
      %p129 = por %p127, %p128
      %p130 = scmp.ne.s32.totalorder %s116, %s117
      %p131 = scmp.eq.s32.totalorder %s19, 3
      %p132 = por %p130, %p131
      %p134 = scmp.ne.s32.totalorder %s117, %s133
      %p135 = scmp.eq.s32.totalorder %s19, 0
      %p136 = por %p134, %p135
      %s137 = ssub.s32 %s20, %s32
      %p138 = scmp.eq.s32.totalorder %s137, 0
      %s140 = sadd.s32 %s139, 1
      %s141 = scalar_select %p138, %s139, %s140
      %p144 = pneg %p138
      %p145 = scmp.eq.s32.totalorder %s13, 3
      %p146 = por %p144, %p145
      %p147 = scmp.ne.s32.totalorder %s139, %s142
      %p148 = scmp.eq.s32.totalorder %s13, 0
      %p149 = por %p147, %p148
      %p150 = scmp.ne.s32.totalorder %s139, %s142
      %p151 = scmp.eq.s32.totalorder %s18, 3
      %p152 = por %p150, %p151
      %p153 = scmp.ne.s32.totalorder %s142, %s143
      %p154 = scmp.eq.s32.totalorder %s18, 0
      %p155 = por %p153, %p154
      %p156 = scmp.ne.s32.totalorder %s142, %s143
      %p157 = scmp.eq.s32.totalorder %s19, 3
      %p158 = por %p156, %p157
      %p160 = scmp.ne.s32.totalorder %s143, %s159
      %p161 = scmp.eq.s32.totalorder %s19, 0
      %p162 = por %p160, %p161
      %p163 = scmp.le.s32.totalorder 1, %s13
      %p164 = scmp.lt.s32.totalorder %s13, 5
      %p165 = pnand %p163, %p164
      %p166 = pneg %p165
      // Predicated region
      $region9: #{tpu_custom_call.1} parent=5 // pred_check
        _
      $region10: #{tpu_custom_call.1} parent=5 // pred_check_branch
        %168 = sbr.rel (%p165) target = $region12
      $region11: #{tpu_custom_call.1} parent=5 // pred_region
        %s169 = ssub.s32 %s13, 1
      $region12: #{tpu_custom_call.1} parent=5 // pred_fallthru
        _
      %p170 = scmp.lt.s32.totalorder %s13, 4
      // Predicated region
      $region13: #{tpu_custom_call.1} parent=5 // pred_check
        %p171 = pneg %p170
      $region14: #{tpu_custom_call.1} parent=5 // pred_check_branch
        %173 = sbr.rel (%p171) target = $region16
      $region15: #{tpu_custom_call.1} parent=5 // pred_region
        // Predicated region
        $region17: #{tpu_custom_call.1} parent=15 // pred_check
          %p174 = pneg %p45
        $region18: #{tpu_custom_call.1} parent=15 // pred_check_branch
          %176 = sbr.rel (%p174) target = $region20
        $region19: #{tpu_custom_call.1} parent=15 // pred_region
          %s177 = smul.u32 16, %s21
          %p178 = scmp.lt.s32.totalorder %s177, 31
          %s179 = scalar_select %p178, %s177, 31
          %s180 = smul.addr %s179, 8
          %s181 = scalar_lea.vmem %s0, %s180
          %s182 = smul.u32 16, %s21
        $region20: #{tpu_custom_call.1} parent=15 // pred_fallthru
          _
        // Predicated region
        $region21: #{tpu_custom_call.1} parent=15 // pred_check
          %p183 = pneg %p71
        $region22: #{tpu_custom_call.1} parent=15 // pred_check_branch
          %185 = sbr.rel (%p183) target = $region24
        $region23: #{tpu_custom_call.1} parent=15 // pred_region
          %p186 = scmp.lt.s32.totalorder %s20, 1
          %s187 = scalar_select %p186, %s20, 1
          %s188 = scalar_lea.vmem %s1, %s187
        $region24: #{tpu_custom_call.1} parent=15 // pred_fallthru
          _
        // Predicated region
        $region25: #{tpu_custom_call.1} parent=15 // pred_check
          %p189 = pneg %p97
        $region26: #{tpu_custom_call.1} parent=15 // pred_check_branch
          %191 = sbr.rel (%p189) target = $region28
        $region27: #{tpu_custom_call.1} parent=15 // pred_region
          %p192 = scmp.lt.s32.totalorder %s20, 1
          %s193 = scalar_select %p192, %s20, 1
          %s194 = scalar_lea.vmem %s2, %s193
        $region28: #{tpu_custom_call.1} parent=15 // pred_fallthru
          _
        // Predicated region
        $region29: #{tpu_custom_call.1} parent=15 // pred_check
          %p195 = pneg %p123
        $region30: #{tpu_custom_call.1} parent=15 // pred_check_branch
          %197 = sbr.rel (%p195) target = $region32
        $region31: #{tpu_custom_call.1} parent=15 // pred_region
          %p198 = scmp.lt.s32.totalorder %s20, 1
          %s199 = scalar_select %p198, %s20, 1
          %s200 = scalar_lea.vmem %s3, %s199
        $region32: #{tpu_custom_call.1} parent=15 // pred_fallthru
          _
      $region16: #{tpu_custom_call.1} parent=5 // pred_fallthru
        _
      %p201 = scmp.le.s32.totalorder 1, %s13
      %p202 = scmp.lt.s32.totalorder %s13, 5
      %p203 = pnand %p201, %p202
      %p204 = pneg %p203
      // Predicated region
      $region33: #{tpu_custom_call.1} parent=5 // pred_check
        _
      $region34: #{tpu_custom_call.1} parent=5 // pred_check_branch
        %206 = sbr.rel (%p203) target = $region36
      $region35: #{tpu_custom_call.1} parent=5 // pred_region
        %s207 = ssub.s32 %s13, 1
        %s208 = smul.u32 16, %s23
        %p209 = scmp.lt.s32.totalorder %s208, 31
        %s210 = scalar_select %p209, %s208, 31
        %s211 = smul.addr %s210, 8
        %s212 = scalar_lea.vmem %s0, %s211
        %p213 = pneg %p51
        %p214 = pneg %p48
        %p215 = scmp.lt.s32.totalorder %s22, 1
        %s216 = scalar_select %p215, %s22, 1
        %s217 = scalar_lea.vmem %s1, %s216
        %p218 = pneg %p77
        %p219 = pneg %p74
        %p220 = scmp.lt.s32.totalorder %s22, 1
        %s221 = scalar_select %p220, %s22, 1
        %s222 = scalar_lea.vmem %s2, %s221
        %p223 = pneg %p103
        %p224 = pneg %p100
        %p225 = scmp.lt.s32.totalorder %s22, 1
        %s226 = scalar_select %p225, %s22, 1
        %s227 = scalar_lea.vmem %s3, %s226
        %p228 = pneg %p129
        %p229 = pneg %p126
        %p230 = pneg %p155
        %p231 = pneg %p152
        %s232 = sand.u32 %s142, 1
        %s233 = scalar_lea.sflag [#allocation5], %s232
        %s234 = sand.u32 %s142, 1
        %s235 = scalar_lea.vmem [#allocation4], %s234
        %s236 = smul.u32 16, %s23
        %p237 = scmp.lt.s32.totalorder %s236, 31
        %s238 = scalar_select %p237, %s236, 31
        %s239 = smul.addr %s238, 8
        %s240 = scalar_lea.vmem %s0, %s239
        %s241 = smul.u32 16, %s23
        %p242 = scmp.lt.s32.totalorder %s22, 1
        %s243 = scalar_select %p242, %s22, 1
        %s244 = scalar_lea.vmem %s1, %s243
        %p245 = scmp.lt.s32.totalorder %s22, 1
        %s246 = scalar_select %p245, %s22, 1
        %s247 = scalar_lea.vmem %s2, %s246
        %p248 = scmp.lt.s32.totalorder %s22, 1
        %s249 = scalar_select %p248, %s22, 1
        %s250 = scalar_lea.vmem %s3, %s249
        %p251 = scmp.eq.s32.totalorder %s23, 0
        // Predicated region
        $region37: #{tpu_custom_call.1} parent=35 // pred_check
          %p252 = pneg %p251
        $region38: #{tpu_custom_call.1} parent=35 // pred_check_branch
          %254 = sbr.rel (%p252) target = $region40
        $region39: #{tpu_custom_call.1} parent=35 // pred_region
          %255 = vst [vmem:[#allocation2] sm:$0x1] 0.0
          %256 = vst [vmem:[#allocation3] sm:$0x1] 0.0
        $region40: #{tpu_custom_call.1} parent=35 // pred_fallthru
          _
        %v257 = vld [vmem:[%s240] sm:$0xff]
        %v258 = vld [vmem:[%s240 + $0x8] sm:$0xff]
        %v259 = vld [vmem:[%s240 + $0x10] sm:$0xff]
        %v260 = vld [vmem:[%s240 + $0x18] sm:$0xff]
        %v261 = vld [vmem:[%s240 + $0x20] sm:$0xff]
        %v262 = vld [vmem:[%s240 + $0x28] sm:$0xff]
        %v263 = vld [vmem:[%s240 + $0x30] sm:$0xff]
        %v264 = vld [vmem:[%s240 + $0x38] sm:$0xff]
        %v265 = vld [vmem:[%s240 + $0x40] sm:$0xff]
        %v266 = vld [vmem:[%s240 + $0x48] sm:$0xff]
        %v267 = vld [vmem:[%s240 + $0x50] sm:$0xff]
        %v268 = vld [vmem:[%s240 + $0x58] sm:$0xff]
        %v269 = vld [vmem:[%s240 + $0x60] sm:$0xff]
        %v270 = vld [vmem:[%s240 + $0x68] sm:$0xff]
        %v271 = vld [vmem:[%s240 + $0x70] sm:$0xff]
        %v272 = vld [vmem:[%s240 + $0x78] sm:$0xff]
        %v273 = vld [vmem:[%s244] sm:$0x1]
        %275 = vset.pattern.permute.xlu0 0
        %276 = vperm.xlu0 %275, %v257
        %v277 = vpop.permute.xlu0 %276
        %280 = vset.pattern.permute.xlu0 0
        %281 = vperm.xlu0 %280, %v258
        %v282 = vpop.permute.xlu0 %281
        %285 = vset.pattern.permute.xlu0 0
        %286 = vperm.xlu0 %285, %v259
        %v287 = vpop.permute.xlu0 %286
        %290 = vset.pattern.permute.xlu0 0
        %291 = vperm.xlu0 %290, %v260
        %v292 = vpop.permute.xlu0 %291
        %295 = vset.pattern.permute.xlu0 0
        %296 = vperm.xlu0 %295, %v261
        %v297 = vpop.permute.xlu0 %296
        %300 = vset.pattern.permute.xlu0 0
        %301 = vperm.xlu0 %300, %v262
        %v302 = vpop.permute.xlu0 %301
        %305 = vset.pattern.permute.xlu0 0
        %306 = vperm.xlu0 %305, %v263
        %v307 = vpop.permute.xlu0 %306
        %310 = vset.pattern.permute.xlu0 0
        %311 = vperm.xlu0 %310, %v264
        %v312 = vpop.permute.xlu0 %311
        %315 = vset.pattern.permute.xlu0 0
        %316 = vperm.xlu0 %315, %v265
        %v317 = vpop.permute.xlu0 %316
        %320 = vset.pattern.permute.xlu0 0
        %321 = vperm.xlu0 %320, %v266
        %v322 = vpop.permute.xlu0 %321
        %325 = vset.pattern.permute.xlu0 0
        %326 = vperm.xlu0 %325, %v267
        %v327 = vpop.permute.xlu0 %326
        %330 = vset.pattern.permute.xlu0 0
        %331 = vperm.xlu0 %330, %v268
        %v332 = vpop.permute.xlu0 %331
        %335 = vset.pattern.permute.xlu0 0
        %336 = vperm.xlu0 %335, %v269
        %v337 = vpop.permute.xlu0 %336
        %340 = vset.pattern.permute.xlu0 0
        %341 = vperm.xlu0 %340, %v270
        %v342 = vpop.permute.xlu0 %341
        %345 = vset.pattern.permute.xlu0 0
        %346 = vperm.xlu0 %345, %v271
        %v347 = vpop.permute.xlu0 %346
        %350 = vset.pattern.permute.xlu0 0
        %351 = vperm.xlu0 %350, %v272
        %v352 = vpop.permute.xlu0 %351
        %v355 = vperm.slane %v273, 0
        %vm357 = vcmp.lt.f32.partialorder %v277, %v355
        %vm358 = vcmp.lt.f32.partialorder %v282, %v355
        %vm359 = vcmp.lt.f32.partialorder %v287, %v355
        %vm360 = vcmp.lt.f32.partialorder %v292, %v355
        %vm361 = vcmp.lt.f32.partialorder %v297, %v355
        %vm362 = vcmp.lt.f32.partialorder %v302, %v355
        %vm363 = vcmp.lt.f32.partialorder %v307, %v355
        %vm364 = vcmp.lt.f32.partialorder %v312, %v355
        %vm365 = vcmp.lt.f32.partialorder %v317, %v355
        %vm366 = vcmp.lt.f32.partialorder %v322, %v355
        %vm367 = vcmp.lt.f32.partialorder %v327, %v355
        %vm368 = vcmp.lt.f32.partialorder %v332, %v355
        %vm369 = vcmp.lt.f32.partialorder %v337, %v355
        %vm370 = vcmp.lt.f32.partialorder %v342, %v355
        %vm371 = vcmp.lt.f32.partialorder %v347, %v355
        %vm372 = vcmp.lt.f32.partialorder %v352, %v355
        %v373 = vld [vmem:[#allocation2] sm:$0x1]
        %374 = vset.pattern.permute.xlu0 1
        %375 = vperm.xlu0 %374, %v257
        %v376 = vpop.permute.xlu0 %375
        %378 = vset.pattern.permute.xlu0 1
        %379 = vperm.xlu0 %378, %v258
        %v380 = vpop.permute.xlu0 %379
        %382 = vset.pattern.permute.xlu0 1
        %383 = vperm.xlu0 %382, %v259
        %v384 = vpop.permute.xlu0 %383
        %386 = vset.pattern.permute.xlu0 1
        %387 = vperm.xlu0 %386, %v260
        %v388 = vpop.permute.xlu0 %387
        %390 = vset.pattern.permute.xlu0 1
        %391 = vperm.xlu0 %390, %v261
        %v392 = vpop.permute.xlu0 %391
        %394 = vset.pattern.permute.xlu0 1
        %395 = vperm.xlu0 %394, %v262
        %v396 = vpop.permute.xlu0 %395
        %398 = vset.pattern.permute.xlu0 1
        %399 = vperm.xlu0 %398, %v263
        %v400 = vpop.permute.xlu0 %399
        %402 = vset.pattern.permute.xlu0 1
        %403 = vperm.xlu0 %402, %v264
        %v404 = vpop.permute.xlu0 %403
        %406 = vset.pattern.permute.xlu0 1
        %407 = vperm.xlu0 %406, %v265
        %v408 = vpop.permute.xlu0 %407
        %410 = vset.pattern.permute.xlu0 1
        %411 = vperm.xlu0 %410, %v266
        %v412 = vpop.permute.xlu0 %411
        %414 = vset.pattern.permute.xlu0 1
        %415 = vperm.xlu0 %414, %v267
        %v416 = vpop.permute.xlu0 %415
        %418 = vset.pattern.permute.xlu0 1
        %419 = vperm.xlu0 %418, %v268
        %v420 = vpop.permute.xlu0 %419
        %422 = vset.pattern.permute.xlu0 1
        %423 = vperm.xlu0 %422, %v269
        %v424 = vpop.permute.xlu0 %423
        %426 = vset.pattern.permute.xlu0 1
        %427 = vperm.xlu0 %426, %v270
        %v428 = vpop.permute.xlu0 %427
        %430 = vset.pattern.permute.xlu0 1
        %431 = vperm.xlu0 %430, %v271
        %v432 = vpop.permute.xlu0 %431
        %434 = vset.pattern.permute.xlu0 1
        %435 = vperm.xlu0 %434, %v272
        %v436 = vpop.permute.xlu0 %435
        %v438 = vsel %vm357, 0.0, %v376
        %v439 = vsel %vm358, 0.0, %v380
        %v440 = vsel %vm359, 0.0, %v384
        %v441 = vsel %vm360, 0.0, %v388
        %v442 = vsel %vm361, 0.0, %v392
        %v443 = vsel %vm362, 0.0, %v396
        %v444 = vsel %vm363, 0.0, %v400
        %v445 = vsel %vm364, 0.0, %v404
        %v446 = vsel %vm365, 0.0, %v408
        %v447 = vsel %vm366, 0.0, %v412
        %v448 = vsel %vm367, 0.0, %v416
        %v449 = vsel %vm368, 0.0, %v420
        %v450 = vsel %vm369, 0.0, %v424
        %v451 = vsel %vm370, 0.0, %v428
        %v452 = vsel %vm371, 0.0, %v432
        %v453 = vsel %vm372, 0.0, %v436
        %v454 = vadd.f32 %v438, %v439
        %v455 = vadd.f32 %v454, %v440
        %v456 = vadd.f32 %v455, %v441
        %v457 = vadd.f32 %v456, %v442
        %v458 = vadd.f32 %v457, %v443
        %v459 = vadd.f32 %v458, %v444
        %v460 = vadd.f32 %v459, %v445
        %v461 = vadd.f32 %v460, %v446
        %v462 = vadd.f32 %v461, %v447
        %v463 = vadd.f32 %v462, %v448
        %v464 = vadd.f32 %v463, %v449
        %v465 = vadd.f32 %v464, %v450
        %v466 = vadd.f32 %v465, %v451
        %v467 = vadd.f32 %v466, %v452
        %v468 = vadd.f32 %v467, %v453
        %v469 = vrot.slane %v468, 4
        %v470 = vadd.f32 %v468, %v469
        %v471 = vrot.slane %v470, 2
        %v472 = vadd.f32 %v470, %v471
        %v473 = vrot.slane %v472, 1
        %v474 = vadd.f32 %v472, %v473
        %v475 = vadd.f32 %v373, %v474
        %476 = vst [vmem:[#allocation2] sm:$0x1] %v475
        %v477 = vld [vmem:[#allocation3] sm:$0x1]
        %v478 = vsel %vm357, 0.0, 1.0
        %v479 = vsel %vm358, 0.0, 1.0
        %v480 = vsel %vm359, 0.0, 1.0
        %v481 = vsel %vm360, 0.0, 1.0
        %v482 = vsel %vm361, 0.0, 1.0
        %v483 = vsel %vm362, 0.0, 1.0
        %v484 = vsel %vm363, 0.0, 1.0
        %v485 = vsel %vm364, 0.0, 1.0
        %v486 = vsel %vm365, 0.0, 1.0
        %v487 = vsel %vm366, 0.0, 1.0
        %v488 = vsel %vm367, 0.0, 1.0
        %v489 = vsel %vm368, 0.0, 1.0
        %v490 = vsel %vm369, 0.0, 1.0
        %v491 = vsel %vm370, 0.0, 1.0
        %v492 = vsel %vm371, 0.0, 1.0
        %v493 = vsel %vm372, 0.0, 1.0
        %v494 = vadd.f32 %v478, %v479
        %v495 = vadd.f32 %v494, %v480
        %v496 = vadd.f32 %v495, %v481
        %v497 = vadd.f32 %v496, %v482
        %v498 = vadd.f32 %v497, %v483
        %v499 = vadd.f32 %v498, %v484
        %v500 = vadd.f32 %v499, %v485
        %v501 = vadd.f32 %v500, %v486
        %v502 = vadd.f32 %v501, %v487
        %v503 = vadd.f32 %v502, %v488
        %v504 = vadd.f32 %v503, %v489
        %v505 = vadd.f32 %v504, %v490
        %v506 = vadd.f32 %v505, %v491
        %v507 = vadd.f32 %v506, %v492
        %v508 = vadd.f32 %v507, %v493
        %v509 = vrot.slane %v508, 4
        %v510 = vadd.f32 %v508, %v509
        %v511 = vrot.slane %v510, 2
        %v512 = vadd.f32 %v510, %v511
        %v513 = vrot.slane %v512, 1
        %v514 = vadd.f32 %v512, %v513
        %v515 = vadd.f32 %v477, %v514
        %516 = vst [vmem:[#allocation3] sm:$0x1] %v515
        %p517 = scmp.eq.s32.totalorder %s23, 1
        // Predicated region
        $region41: #{tpu_custom_call.1} parent=35 // pred_check
          %p518 = pneg %p517
        $region42: #{tpu_custom_call.1} parent=35 // pred_check_branch
          %520 = sbr.rel (%p518) target = $region44
        $region43: #{tpu_custom_call.1} parent=35 // pred_region
          %v521 = vld [vmem:[#allocation2] sm:$0x1]
          %v522 = vlog2.pop %v521
          %v523 = vmul.f32 %v522, 0.6931472
          %v524 = vld [vmem:[#allocation3] sm:$0x1]
          %v525 = vlog2.pop %v524
          %v526 = vmul.f32 %v525, 0.6931472
          %v527 = vsub.f32 %v523, %v526
          %v528 = vld [vmem:[%s247] sm:$0x1]
          %v529 = vsub.f32 %v528, %v527
          %v530 = vld [vmem:[%s250] sm:$0x1]
          %v531 = vmul.f32 %v529, %v530
          %532 = vst [vmem:[%s235] sm:$0x1] %v531
        $region44: #{tpu_custom_call.1} parent=35 // pred_fallthru
          _
        %s533 = sand.u32 %s142, 1
        %s534 = scalar_lea.sflag [#allocation5], %s533
        %s535 = sand.u32 %s142, 1
        %s536 = scalar_lea.vmem [#allocation4], %s535
        // Predicated region
        $region45: #{tpu_custom_call.1} parent=35 // pred_check
          %p537 = pneg %p152
        $region46: #{tpu_custom_call.1} parent=35 // pred_check_branch
          %539 = sbr.rel (%p537) target = $region48
        $region47: #{tpu_custom_call.1} parent=35 // pred_region
          %541 = vsyncadd %s534, 0
          %s542 = scalar_lea.hbm %s4, %s22
          %s544 = sshll.u32 %s536, 4
          %s545 = int_to_ptr.vmem [resolvable:$true] %s544
          %s546 = sshll.u32 %s542, 4
          %s547 = int_to_ptr.hbm [resolvable:$true] %s546
          %549 = dma.vmem_to_hbm [thread:$0]  %s545, 16, %s547, %s534
        $region48: #{tpu_custom_call.1} parent=35 // pred_fallthru
          _
      $region36: #{tpu_custom_call.1} parent=5 // pred_fallthru
        _
      %p550 = scmp.le.s32.totalorder 2, %s13
      // Predicated region
      $region49: #{tpu_custom_call.1} parent=5 // pred_check
        %p551 = pneg %p550
      $region50: #{tpu_custom_call.1} parent=5 // pred_check_branch
        %553 = sbr.rel (%p551) target = $region52
      $region51: #{tpu_custom_call.1} parent=5 // pred_region
        %s554 = ssub.s32 %s13, 2
        // Predicated region
        $region53: #{tpu_custom_call.1} parent=51 // pred_check
          %p555 = pneg %p158
        $region54: #{tpu_custom_call.1} parent=51 // pred_check_branch
          %557 = sbr.rel (%p555) target = $region56
        $region55: #{tpu_custom_call.1} parent=51 // pred_region
          %s558 = sand.u32 %s143, 1
          %s559 = scalar_lea.sflag [#allocation5], %s558
          %s560 = sand.u32 %s143, 1
          %s561 = scalar_lea.vmem [#allocation4], %s560
          %563 = dma.done %s559, 16
        $region56: #{tpu_custom_call.1} parent=51 // pred_fallthru
          _
      $region52: #{tpu_custom_call.1} parent=5 // pred_fallthru
        _
    $region6: #{tpu_custom_call.1} parent=1 // loop_footer
      %s17 = sadd.s32 1, %s13
    $region7: #{tpu_custom_call.1} parent=1 // loop_footer_branch
      %12 = sbr.rel target = $region3
    $region8: #{tpu_custom_call.1} parent=1 // loop_exit
      _
    %564 = vsyncpa [#allocation5], 1
    %s565 = scalar_lea.sflag [#allocation5], 1
    %566 = vsyncpa %s565, 1

</llo_original>
